<compile_context>
chip_gen: v6e
topology: v6e:2x2x1
jax: 0.10.0
libtpu: 0.0.40
codegen_flags: <defaults>
</compile_context>

<pallas_src>
import math

import jax
import jax.numpy as jnp
from jax.experimental import pallas as pl
from jax.experimental.pallas import tpu as pltpu


_TARGET_BLOCK_BYTES = 4 << 20        # ~4 MiB blocks: mem-bound copy sweet spot
_VMEM_LIMIT_BYTES = 32 << 20         # 2 arrays x 2 buffers x 4 MiB = 16 MiB + slack
_LANE_CANDIDATES = (8192, 4096, 2048, 1024, 512, 256, 128)


def _copy_kernel(x_ref, o_ref):
    # Pure copy: identical in/out block shapes, no in-kernel relayout.
    o_ref[...] = x_ref[...]


def _choose_slab(total: int):
    """Pick (rows, cols) with cols a multiple of 128 dividing total, prefer rows>=8."""
    if total % 128 != 0:
        return None
    largest = None
    for c in _LANE_CANDIDATES:
        if total % c == 0:
            if largest is None:
                largest = c
            if total // c >= 8:
                return total // c, c
    return total // largest, largest


def _row_tile(rows: int, cols: int, itemsize: int) -> int:
    """Rows per block: multiple of 8 sized to the byte budget, or the full dim."""
    if rows <= 8:
        return rows
    budget_rows = max(8, (_TARGET_BLOCK_BYTES // (cols * itemsize)) // 8 * 8)
    if budget_rows >= rows:
        return rows                   # single block along rows (full dim is legal)
    return budget_rows


def _fallback_tiles(n: int, flat: int, itemsize: int):
    """Tiles for the logical (n, flat) view when total isn't a 128-multiple."""
    if flat <= 128:
        tf = flat                     # full dim (masked lanes are unavoidable)
    else:
        lane_budget = max(128, (_TARGET_BLOCK_BYTES // (8 * itemsize)) // 128 * 128)
        tf = min(flat, lane_budget)
        if tf < flat:
            # A multiple-of-128 block is legal even if `flat` isn't; the last
            # partial block is masked.
            tf = tf // 128 * 128
    if n <= 8:
        tn = n
    else:
        rows = max(8, (_TARGET_BLOCK_BYTES // (tf * itemsize)) // 8 * 8)
        tn = n if rows >= n else rows
    return tn, tf


def flatten_pallas(x: jax.Array, *, donate: bool = False) -> jax.Array:
    n = x.shape[0]
    flat = math.prod(x.shape[1:]) if x.ndim > 1 else 1

    if donate:
        # Zero-copy path: flatten is a metadata op.  Pair with
        # jax.jit(..., donate_argnums=...) at the call site; without real
        # donation XLA would insert a defensive copy anyway.
        return x.reshape(n, flat)

    itemsize = jnp.dtype(x.dtype).itemsize
    total = n * flat

    slab = _choose_slab(total)
    if slab is not None:
        rows, cols = slab
        tn = _row_tile(rows, cols, itemsize)
        x2 = x.reshape(rows, cols)    # free metadata reshape (row-major)
        out2 = pl.pallas_call(
            _copy_kernel,
            out_shape=jax.ShapeDtypeStruct((rows, cols), x.dtype),
            grid=(pl.cdiv(rows, tn),),
            in_specs=[pl.BlockSpec((tn, cols), lambda i: (i, 0))],
            out_specs=pl.BlockSpec((tn, cols), lambda i: (i, 0)),
            compiler_params=pltpu.CompilerParams(
                # Row axis is independent copies -> shardable across v7x's
                # 2 TensorCores; measured no-op (but free) on v5e/v6e.
                dimension_semantics=("parallel",),
                vmem_limit_bytes=_VMEM_LIMIT_BYTES,
            ),
        )(x2)
        return out2.reshape(n, flat)  # free metadata reshape back

    # Fallback: total not a multiple of 128 -> tile the logical (n, flat) view.
    tn, tf = _fallback_tiles(n, flat, itemsize)
    x2 = x.reshape(n, flat)
    return pl.pallas_call(
        _copy_kernel,
        out_shape=jax.ShapeDtypeStruct((n, flat), x.dtype),
        grid=(pl.cdiv(n, tn), pl.cdiv(flat, tf)),
        in_specs=[pl.BlockSpec((tn, tf), lambda i, j: (i, j))],
        out_specs=pl.BlockSpec((tn, tf), lambda i, j: (i, j)),
        compiler_params=pltpu.CompilerParams(
            dimension_semantics=("parallel", "parallel"),
            vmem_limit_bytes=_VMEM_LIMIT_BYTES,
        ),
    )(x2)


if __name__ == "__main__":
    key = jax.random.PRNGKey(0)
    # NCHW, small shapes consistent with a conv-net feature map.
    x = jax.random.normal(key, (2, 4, 16, 16), dtype=jnp.float32)

    out = flatten_pallas(x)
    jax.block_until_ready(out)

    # Sanity check against pure-JAX reference (torch .view semantics).
    ref = x.reshape(x.shape[0], -1)
    assert out.shape == (2, 4 * 16 * 16), out.shape
    assert out.dtype == x.dtype
    assert jnp.array_equal(out, ref), "mismatch vs reference flatten"

    print("KERNEL_OK")
</pallas_src>

<mosaic_0001>
module attributes {stable_mosaic.version = 11 : i64} {
  func.func @_copy_kernel(%arg0: i32, %arg1: memref<8x256xf32, #tpu.memory_space<vmem>>, %arg2: memref<8x256xf32, #tpu.memory_space<vmem>>) attributes {dimension_semantics = [#tpu.dimension_semantics<parallel>], iteration_bounds = array<i64: 1>, scalar_prefetch = 0 : i64, scratch_operands = 0 : i64, tpu.core_type = #tpu.core_type<tc>, window_params = [{transform_indices = @transform_0, window_bounds = array<i64: 8, 256>}, {transform_indices = @transform_1, window_bounds = array<i64: 8, 256>}]} {
    %c0 = arith.constant 0 : index
    %c0_0 = arith.constant 0 : index
    %0 = vector.load %arg1[%c0, %c0_0] : memref<8x256xf32, #tpu.memory_space<vmem>>, vector<8x256xf32>
    %c0_1 = arith.constant 0 : index
    %c0_2 = arith.constant 0 : index
    %1 = vector.load %arg2[%c0_1, %c0_2] : memref<8x256xf32, #tpu.memory_space<vmem>>, vector<8x256xf32>
    tpu.vector_store %arg2[%c0_1, %c0_2], %0 {strides = array<i32>} : memref<8x256xf32, #tpu.memory_space<vmem>>, vector<8x256xf32>,
    return
  }
  func.func @transform_0(%arg0: i32) -> (i32, i32) {
    %c0_i32 = arith.constant 0 : i32
    %c0_i32_0 = arith.constant 0 : i32
    return %arg0, %c0_i32 : i32, i32
  }
  func.func @transform_1(%arg0: i32) -> (i32, i32) {
    %c0_i32 = arith.constant 0 : i32
    %c0_i32_0 = arith.constant 0 : i32
    return %arg0, %c0_i32 : i32, i32
  }
}

</mosaic_0001>

<llo_original>
// kernel: tpu_custom_call.1
$region0: #{tpu_custom_call.1}
  #allocation0 [shape = 'u32[]', space=smem, size = 0x4, offset = 0x4, fixed_abs, tag = 'smem constant byte address 0x4 - core index']
  #allocation1 [shape = 'u32[144,128]{1,0:T(1,128)}', space=vmem, size = 0x12000, scoped, tag = 'internal scratch']
  %s0 = inlined_call_operand.hbm [shape: f32[8,256], index: 0, kind: input, shape index: {}]
  %s1 = inlined_call_operand.hbm [shape: f32[8,256], index: 1, kind: output, shape index: {}]
  %s2 = sld [smem:[#allocation0]]
  $region18: #{tpu_custom_call.1} parent=0
    _
  %s4 = ssub.s32 1, %s2
  %s5 = scalar_select 0, %s4, %s2
  $region1: #{tpu_custom_call.1} parent=0
    #allocation2 [shape = 'u8[8192]{0}', space=vmem, size = 0x2000, scoped, tag = 'input window, operand 0, single buffered']
    #allocation3 [shape = 's32[1]{0}', space=sflag, size = 0x4, scoped, tag = 'scoped memory for tpu_custom_call.1']
    #allocation4 [shape = 's32[1]{0}', space=sflag, size = 0x4, scoped, tag = 'scoped memory for tpu_custom_call.1']
    #allocation5 [shape = 'u8[8192]{0}', space=vmem, size = 0x2000, scoped, tag = 'output window, operand 0, single buffered']
    %6 = vsyncpa [#allocation3], 0
    %7 = vsyncpa [#allocation4], 0
    // Predicated region
    $region2: #{tpu_custom_call.1} parent=1 // pred_check
      _
    $region3: #{tpu_custom_call.1} parent=1 // pred_check_branch
      %9 = sbr.rel (0) target = $region5
    $region4: #{tpu_custom_call.1} parent=1 // pred_region
      %s11 = ssub.s32 256, 256
      %12 = vsyncadd [#allocation3], %s11
      %s14 = sshll.u32 [#allocation2], 4
      %s15 = int_to_ptr.vmem [resolvable:$true] %s14
      %17 = dma.hbm_to_vmem [thread:$0]  %s0, 256, %s15, [#allocation3]
    $region5: #{tpu_custom_call.1} parent=1 // pred_fallthru
      _
    // Predicated region
    $region6: #{tpu_custom_call.1} parent=1 // pred_check
      _
    $region7: #{tpu_custom_call.1} parent=1 // pred_check_branch
      %19 = sbr.rel (0) target = $region9
    $region8: #{tpu_custom_call.1} parent=1 // pred_region
      %20 = dma.done [#allocation3], 256
    $region9: #{tpu_custom_call.1} parent=1 // pred_fallthru
      _
    %v21 = vld [vmem:[#allocation2] sm:$0xff]
    %v22 = vld [vmem:[#allocation2 + $0x8] sm:$0xff]
    %23 = vst [vmem:[#allocation5] sm:$0xff] %v21
    %24 = vst [vmem:[#allocation5 + $0x8] sm:$0xff] %v22
    // Predicated region
    $region10: #{tpu_custom_call.1} parent=1 // pred_check
      _
    $region11: #{tpu_custom_call.1} parent=1 // pred_check_branch
      %26 = sbr.rel (0) target = $region13
    $region12: #{tpu_custom_call.1} parent=1 // pred_region
      %s28 = ssub.s32 256, 256
      %29 = vsyncadd [#allocation4], %s28
      %s31 = sshll.u32 [#allocation5], 4
      %s32 = int_to_ptr.vmem [resolvable:$true] %s31
      %34 = dma.vmem_to_hbm [thread:$0]  %s32, 256, %s1, [#allocation4]
    $region13: #{tpu_custom_call.1} parent=1 // pred_fallthru
      _
    // Predicated region
    $region14: #{tpu_custom_call.1} parent=1 // pred_check
      _
    $region15: #{tpu_custom_call.1} parent=1 // pred_check_branch
      %36 = sbr.rel (0) target = $region17
    $region16: #{tpu_custom_call.1} parent=1 // pred_region
      %37 = dma.done [#allocation4], 256
    $region17: #{tpu_custom_call.1} parent=1 // pred_fallthru
      _
    %38 = vsyncpa [#allocation3], 1
    %39 = vsyncpa [#allocation4], 1

</llo_original>
